<compile_context>
chip_gen: v5e
topology: v5e:2x2
jax: 0.10.0
libtpu: 0.0.40
codegen_flags: <defaults>
</compile_context>

<pallas_src>
import jax
import jax.numpy as jnp
import numpy as np
from jax.experimental import pallas as pl
from jax.experimental.pallas import tpu as pltpu

NEG_SLOPE = 0.01  # F.leaky_relu default negative_slope


def _leaky_relu(x):
    return jnp.where(x > 0, x, NEG_SLOPE * x)


def ginn_kernel(x_ref, w1_ref, b1_ref, w2_ref, b2_ref, o_ref):
    # Natural (N, C) orientation: batch rows on the sublane axis, features
    # on the lane axis -> no wrapper transposes are required.
    x = x_ref[...]                                                   # (tile_n, 120)
    # Layer 1 on the MXU, f32 accumulation regardless of streaming dtype.
    h = jnp.dot(x, w1_ref[...], preferred_element_type=jnp.float32)  # (tile_n, 60)
    h = _leaky_relu(h + b1_ref[...])                                 # bias (1, 60) broadcasts
    # Layer 2: hidden activation and W2 kept f32 (tiny, VMEM-resident) so a
    # bf16 streaming path only quantises the input, not the intermediate.
    y = jnp.dot(h, w2_ref[...], preferred_element_type=jnp.float32)  # (tile_n, 30)
    o_ref[...] = _leaky_relu(y + b2_ref[...]).astype(o_ref.dtype)


def ginn_forward(x, w1_oi, b1, w2_oi, b2, *, tile_n=8192,
                 in_dtype=None, out_dtype=jnp.float32):
    """GINN forward: LeakyReLU(LeakyReLU(x @ W1^T + b1) @ W2^T + b2).

    x     : (N, 120)
    w1_oi : (60, 120)  torch (out, in) convention
    b1    : (60,)
    w2_oi : (30, 60)
    b2    : (30,)
    returns (N, 30) in out_dtype (default float32)
    """
    n, in_ch = x.shape
    hid_ch = w1_oi.shape[0]
    out_ch = w2_oi.shape[0]

    if in_dtype is not None and x.dtype != in_dtype:
        # NOTE: this cast is its own HBM pass; for the memory-bound large-N
        # regime the producer should hand x over already in bf16.
        x = x.astype(in_dtype)

    # (in, out) layout so the kernel does x @ W with no in-kernel transpose.
    # Transposing the ~29 KiB of weights once in the wrapper is negligible.
    w1_io = jnp.asarray(w1_oi).T.astype(x.dtype)       # (120, 60) streamed dtype
    w2_io = jnp.asarray(w2_oi).T.astype(jnp.float32)   # (60, 30)  kept f32
    b1r = jnp.asarray(b1, jnp.float32).reshape(1, hid_ch)
    b2r = jnp.asarray(b2, jnp.float32).reshape(1, out_ch)

    # Batch tile: multiple of 8 (sublane granularity).  No padding and no
    # power-of-2 clamp; the ragged tail block is handled by Pallas (partial
    # reads/writes).  Clamp to ~n so tiny batches don't DMA an empty tile.
    tile_n = int(max(8, min(tile_n, -(-n // 8) * 8)))
    tile_n = -(-tile_n // 8) * 8
    grid = (pl.cdiv(n, tile_n),)

    param_bytes = (w1_io.size * w1_io.dtype.itemsize + w2_io.size * 4
                   + b1r.size * 4 + b2r.size * 4)
    cost = pl.CostEstimate(
        flops=2 * n * (in_ch * hid_ch + hid_ch * out_ch),
        transcendentals=0,
        bytes_accessed=n * (in_ch * x.dtype.itemsize
                            + out_ch * jnp.dtype(out_dtype).itemsize) + param_bytes,
    )

    return pl.pallas_call(
        ginn_kernel,
        out_shape=jax.ShapeDtypeStruct((n, out_ch), out_dtype),
        grid_spec=pltpu.PrefetchScalarGridSpec(
            num_scalar_prefetch=0,
            grid=grid,
            in_specs=[
                # streamed input: one (tile_n, 120) row block per grid step
                pl.BlockSpec((tile_n, in_ch), lambda i: (i, 0)),
                # weights/biases: constant block index -> fetched once,
                # VMEM-resident across all grid steps (~31 KiB total)
                pl.BlockSpec((in_ch, hid_ch), lambda i: (0, 0)),
                pl.BlockSpec((1, hid_ch), lambda i: (0, 0)),
                pl.BlockSpec((hid_ch, out_ch), lambda i: (0, 0)),
                pl.BlockSpec((1, out_ch), lambda i: (0, 0)),
            ],
            out_specs=pl.BlockSpec((tile_n, out_ch), lambda i: (i, 0)),
        ),
        compiler_params=pltpu.CompilerParams(
            # Independent row tiles.
            # TODO(synk): on v7x check whether "parallel" actually shards the
            # batch axis across the 2 TensorCores; if not, switch to
            # pltpu.CORE_PARALLEL or an explicit pl.core_map split over N.
            dimension_semantics=("parallel",),
        ),
        cost_estimate=cost,
    )(x, w1_io, b1r, w2_io, b2r)


def xavier_uniform(key, shape_out_in, gain):
    """Matches torch.nn.init.xavier_uniform_ on a (out, in) weight."""
    fan_out, fan_in = shape_out_in
    bound = gain * np.sqrt(6.0 / (fan_in + fan_out))
    return jax.random.uniform(key, shape_out_in, jnp.float32, -bound, bound)


def init_params(key):
    in1, out1 = 120, 60
    in2, out2 = 60, 30
    gain = np.sqrt(2.0 / (1.0 + 0.01 ** 2))  # calculate_gain('leaky_relu')
    k1, k2, k3, k4 = jax.random.split(key, 4)
    # torch Linear weight is (out, in).
    w1_oi = xavier_uniform(k1, (out1, in1), gain)
    w2_oi = xavier_uniform(k2, (out2, in2), gain)
    # torch Linear bias default init: U(-1/sqrt(fan_in), 1/sqrt(fan_in))
    b1 = jax.random.uniform(k3, (out1,), jnp.float32,
                            -1.0 / np.sqrt(in1), 1.0 / np.sqrt(in1))
    b2 = jax.random.uniform(k4, (out2,), jnp.float32,
                            -1.0 / np.sqrt(in2), 1.0 / np.sqrt(in2))
    return w1_oi, b1, w2_oi, b2


def reference_forward(x, w1_oi, b1, w2_oi, b2):
    h = _leaky_relu(x @ w1_oi.T + b1)
    return _leaky_relu(h @ w2_oi.T + b2)


if __name__ == "__main__":
    key = jax.random.PRNGKey(0)
    kp, kx1, kx2 = jax.random.split(key, 3)
    w1, b1, w2, b2 = init_params(kp)

    # Small batch consistent with the module (node feature width = 120).
    x_small = jax.random.normal(kx1, (8, 120), dtype=jnp.float32)
    out_small = ginn_forward(x_small, w1, b1, w2, b2)
    jax.block_until_ready(out_small)
    np.testing.assert_allclose(
        np.asarray(out_small),
        np.asarray(reference_forward(x_small, w1, b1, w2, b2)),
        rtol=1e-5, atol=1e-5)
    assert out_small.shape == (8, 30)

    # Ragged batch exercising the partial tail-block path (no padding).
    x_big = jax.random.normal(kx2, (300, 120), dtype=jnp.float32)
    out_big = ginn_forward(x_big, w1, b1, w2, b2)
    jax.block_until_ready(out_big)
    np.testing.assert_allclose(
        np.asarray(out_big),
        np.asarray(reference_forward(x_big, w1, b1, w2, b2)),
        rtol=1e-5, atol=1e-5)
    assert out_big.shape == (300, 30)

    # bf16 streaming path (the memory-bound large-N default); compared
    # against a reference with identically quantised inputs so only the
    # streaming quantisation is tested, not tolerance slack.
    out_bf16 = ginn_forward(x_big, w1, b1, w2, b2, in_dtype=jnp.bfloat16)
    jax.block_until_ready(out_bf16)
    x_q = x_big.astype(jnp.bfloat16).astype(jnp.float32)
    w1_q = w1.astype(jnp.bfloat16).astype(jnp.float32)
    np.testing.assert_allclose(
        np.asarray(out_bf16),
        np.asarray(reference_forward(x_q, w1_q, b1, w2, b2)),
        rtol=1e-2, atol=1e-2)
    assert out_bf16.shape == (300, 30)

    print("KERNEL_OK")
</pallas_src>

<mosaic_0001>
module attributes {stable_mosaic.version = 11 : i64} {
  func.func @ginn_kernel(%arg0: i32, %arg1: memref<8x120xf32, #tpu.memory_space<vmem>>, %arg2: memref<120x60xf32, #tpu.memory_space<vmem>>, %arg3: memref<1x60xf32, #tpu.memory_space<vmem>>, %arg4: memref<60x30xf32, #tpu.memory_space<vmem>>, %arg5: memref<1x30xf32, #tpu.memory_space<vmem>>, %arg6: memref<8x30xf32, #tpu.memory_space<vmem>>) attributes {dimension_semantics = [#tpu.dimension_semantics<parallel>], iteration_bounds = array<i64: 1>, scalar_prefetch = 0 : i64, scratch_operands = 0 : i64, tpu.core_type = #tpu.core_type<tc>, window_params = [{transform_indices = @transform_0, window_bounds = array<i64: 8, 120>}, {pipeline_mode = #tpu.pipeline_mode<synchronous>, transform_indices = @transform_1, window_bounds = array<i64: 120, 60>}, {pipeline_mode = #tpu.pipeline_mode<synchronous>, transform_indices = @transform_2, window_bounds = array<i64: 1, 60>}, {pipeline_mode = #tpu.pipeline_mode<synchronous>, transform_indices = @transform_3, window_bounds = array<i64: 60, 30>}, {pipeline_mode = #tpu.pipeline_mode<synchronous>, transform_indices = @transform_4, window_bounds = array<i64: 1, 30>}, {transform_indices = @transform_5, window_bounds = array<i64: 8, 30>}]} {
    %c0 = arith.constant 0 : index
    %c0_0 = arith.constant 0 : index
    %0 = vector.load %arg1[%c0, %c0_0] : memref<8x120xf32, #tpu.memory_space<vmem>>, vector<8x120xf32>
    %c0_1 = arith.constant 0 : index
    %c0_2 = arith.constant 0 : index
    %1 = vector.load %arg2[%c0_1, %c0_2] : memref<120x60xf32, #tpu.memory_space<vmem>>, vector<120x60xf32>
    %cst = arith.constant dense<0.000000e+00> : vector<8x60xf32>
    %2 = tpu.matmul %0, %1, %cst {dimension_numbers = #tpu.dot_dimension_numbers<[1], [0], [0], [1], [0, 0, 1, 1], [], []>} : vector<8x120xf32>, vector<120x60xf32>, vector<8x60xf32> -> vector<8x60xf32>
    %c0_3 = arith.constant 0 : index
    %c0_4 = arith.constant 0 : index
    %3 = vector.load %arg3[%c0_3, %c0_4] : memref<1x60xf32, #tpu.memory_space<vmem>>, vector<1x60xf32>
    %4 = vector.broadcast %3 : vector<1x60xf32> to vector<8x60xf32>
    %5 = arith.addf %2, %4 : vector<8x60xf32>
    %cst_5 = arith.constant 0.000000e+00 : f32
    %6 = vector.broadcast %cst_5 : f32 to vector<8x60xf32>
    %7 = arith.cmpf ogt, %5, %6 : vector<8x60xf32>
    %cst_6 = arith.constant 0.00999999977 : f32
    %8 = vector.broadcast %cst_6 : f32 to vector<8x60xf32>
    %9 = arith.mulf %8, %5 : vector<8x60xf32>
    %10 = arith.select %7, %5, %9 : vector<8x60xi1>, vector<8x60xf32>
    %c0_7 = arith.constant 0 : index
    %c0_8 = arith.constant 0 : index
    %11 = vector.load %arg4[%c0_7, %c0_8] : memref<60x30xf32, #tpu.memory_space<vmem>>, vector<60x30xf32>
    %cst_9 = arith.constant dense<0.000000e+00> : vector<8x30xf32>
    %12 = tpu.matmul %10, %11, %cst_9 {dimension_numbers = #tpu.dot_dimension_numbers<[1], [0], [0], [1], [0, 0, 1, 1], [], []>} : vector<8x60xf32>, vector<60x30xf32>, vector<8x30xf32> -> vector<8x30xf32>
    %c0_10 = arith.constant 0 : index
    %c0_11 = arith.constant 0 : index
    %13 = vector.load %arg5[%c0_10, %c0_11] : memref<1x30xf32, #tpu.memory_space<vmem>>, vector<1x30xf32>
    %14 = vector.broadcast %13 : vector<1x30xf32> to vector<8x30xf32>
    %15 = arith.addf %12, %14 : vector<8x30xf32>
    %cst_12 = arith.constant 0.000000e+00 : f32
    %16 = vector.broadcast %cst_12 : f32 to vector<8x30xf32>
    %17 = arith.cmpf ogt, %15, %16 : vector<8x30xf32>
    %cst_13 = arith.constant 0.00999999977 : f32
    %18 = vector.broadcast %cst_13 : f32 to vector<8x30xf32>
    %19 = arith.mulf %18, %15 : vector<8x30xf32>
    %20 = arith.select %17, %15, %19 : vector<8x30xi1>, vector<8x30xf32>
    %c0_14 = arith.constant 0 : index
    %c0_15 = arith.constant 0 : index
    %21 = vector.load %arg6[%c0_14, %c0_15] : memref<8x30xf32, #tpu.memory_space<vmem>>, vector<8x30xf32>
    tpu.vector_store %arg6[%c0_14, %c0_15], %20 {strides = array<i32>} : memref<8x30xf32, #tpu.memory_space<vmem>>, vector<8x30xf32>,
    return
  }
  func.func @transform_0(%arg0: i32) -> (i32, i32) {
    %c0_i32 = arith.constant 0 : i32
    %c0_i32_0 = arith.constant 0 : i32
    return %arg0, %c0_i32 : i32, i32
  }
  func.func @transform_1(%arg0: i32) -> (i32, i32) {
    %c0_i32 = arith.constant 0 : i32
    %c0_i32_0 = arith.constant 0 : i32
    %c0_i32_1 = arith.constant 0 : i32
    return %c0_i32, %c0_i32_0 : i32, i32
  }
  func.func @transform_2(%arg0: i32) -> (i32, i32) {
    %c0_i32 = arith.constant 0 : i32
    %c0_i32_0 = arith.constant 0 : i32
    %c0_i32_1 = arith.constant 0 : i32
    return %c0_i32, %c0_i32_0 : i32, i32
  }
  func.func @transform_3(%arg0: i32) -> (i32, i32) {
    %c0_i32 = arith.constant 0 : i32
    %c0_i32_0 = arith.constant 0 : i32
    %c0_i32_1 = arith.constant 0 : i32
    return %c0_i32, %c0_i32_0 : i32, i32
  }
  func.func @transform_4(%arg0: i32) -> (i32, i32) {
    %c0_i32 = arith.constant 0 : i32
    %c0_i32_0 = arith.constant 0 : i32
    %c0_i32_1 = arith.constant 0 : i32
    return %c0_i32, %c0_i32_0 : i32, i32
  }
  func.func @transform_5(%arg0: i32) -> (i32, i32) {
    %c0_i32 = arith.constant 0 : i32
    %c0_i32_0 = arith.constant 0 : i32
    return %arg0, %c0_i32 : i32, i32
  }
}

</mosaic_0001>

<llo_original>
// kernel: tpu_custom_call.1
$region0: #{tpu_custom_call.1}
  #allocation0 [shape = 'u32[]', space=smem, size = 0x4, offset = 0x4, fixed_abs, tag = 'smem constant byte address 0x4 - core index']
  #allocation1 [shape = 'u32[72,128]{1,0:T(1,128)}', space=vmem, size = 0x9000, scoped, tag = 'internal scratch']
  %s0 = inlined_call_operand.vmem [shape: f32[8,120], index: 0, kind: input, shape index: {}]
  %s1 = inlined_call_operand.vmem [shape: f32[120,60], index: 1, kind: input, shape index: {}]
  %s2 = inlined_call_operand.vmem [shape: f32[1,60], index: 2, kind: input, shape index: {}]
  %s3 = inlined_call_operand.vmem [shape: f32[60,30], index: 3, kind: input, shape index: {}]
  %s4 = inlined_call_operand.vmem [shape: f32[1,30], index: 4, kind: input, shape index: {}]
  %s5 = inlined_call_operand.hbm [shape: f32[8,30], index: 5, kind: output, shape index: {}]
  %s6 = sld [smem:[#allocation0]]
  $region30: #{tpu_custom_call.1} parent=0
    _
  %s8 = ssub.s32 1, %s6
  %s9 = scalar_select 0, %s8, %s6
  $region1: #{tpu_custom_call.1} parent=0
    #allocation2 [shape = 'u8[4096]{0}', space=vmem, size = 0x1000, scoped, tag = 'output window, operand 0, single buffered']
    #allocation3 [shape = 's32[1]{0}', space=sflag, size = 0x4, scoped, tag = 'scoped memory for tpu_custom_call.1']
    %10 = vsyncpa [#allocation3], 0
    // Predicated region
    $region2: #{tpu_custom_call.1} parent=1 // pred_check
      _
    $region3: #{tpu_custom_call.1} parent=1 // pred_check_branch
      %12 = sbr.rel (0) target = $region5
    $region4: #{tpu_custom_call.1} parent=1 // pred_region
      _
    $region5: #{tpu_custom_call.1} parent=1 // pred_fallthru
      _
    // Predicated region
    $region6: #{tpu_custom_call.1} parent=1 // pred_check
      _
    $region7: #{tpu_custom_call.1} parent=1 // pred_check_branch
      %14 = sbr.rel (0) target = $region9
    $region8: #{tpu_custom_call.1} parent=1 // pred_region
      _
    $region9: #{tpu_custom_call.1} parent=1 // pred_fallthru
      _
    // Predicated region
    $region10: #{tpu_custom_call.1} parent=1 // pred_check
      _
    $region11: #{tpu_custom_call.1} parent=1 // pred_check_branch
      %16 = sbr.rel (0) target = $region13
    $region12: #{tpu_custom_call.1} parent=1 // pred_region
      _
    $region13: #{tpu_custom_call.1} parent=1 // pred_fallthru
      _
    // Predicated region
    $region14: #{tpu_custom_call.1} parent=1 // pred_check
      _
    $region15: #{tpu_custom_call.1} parent=1 // pred_check_branch
      %18 = sbr.rel (0) target = $region17
    $region16: #{tpu_custom_call.1} parent=1 // pred_region
      _
    $region17: #{tpu_custom_call.1} parent=1 // pred_fallthru
      _
    // Predicated region
    $region18: #{tpu_custom_call.1} parent=1 // pred_check
      _
    $region19: #{tpu_custom_call.1} parent=1 // pred_check_branch
      %20 = sbr.rel (0) target = $region21
    $region20: #{tpu_custom_call.1} parent=1 // pred_region
      _
    $region21: #{tpu_custom_call.1} parent=1 // pred_fallthru
      _
    %v21 = vld [vmem:[%s0] sm:$0xff]
    %v22 = vld [vmem:[%s1] sm:$0xff]
    %v23 = vld [vmem:[%s1 + $0x8] sm:$0xff]
    %v24 = vld [vmem:[%s1 + $0x10] sm:$0xff]
    %v25 = vld [vmem:[%s1 + $0x18] sm:$0xff]
    %v26 = vld [vmem:[%s1 + $0x20] sm:$0xff]
    %v27 = vld [vmem:[%s1 + $0x28] sm:$0xff]
    %v28 = vld [vmem:[%s1 + $0x30] sm:$0xff]
    %v29 = vld [vmem:[%s1 + $0x38] sm:$0xff]
    %v30 = vld [vmem:[%s1 + $0x40] sm:$0xff]
    %v31 = vld [vmem:[%s1 + $0x48] sm:$0xff]
    %v32 = vld [vmem:[%s1 + $0x50] sm:$0xff]
    %v33 = vld [vmem:[%s1 + $0x58] sm:$0xff]
    %v34 = vld [vmem:[%s1 + $0x60] sm:$0xff]
    %v35 = vld [vmem:[%s1 + $0x68] sm:$0xff]
    %v36 = vld [vmem:[%s1 + $0x70] sm:$0xff]
    %v37 = vld [vmem:[%s2] sm:$0x1]
    %v39 = vperm.slane %v37, 0
    %vm41 = vcmask 982016
    %v43 = vsel %vm41, %v21, 0
    %45 = vmatpush.msra.mxu0 0.0
    %46 = vmatpush.msra.mxu0 %v36
    %47 = vmatpush.msra.mxu0 %v35
    %48 = vmatpush.msra.mxu0 %v34
    %49 = vmatpush.msra.mxu0 %v33
    %50 = vmatpush.msra.mxu0 %v32
    %51 = vmatpush.msra.mxu0 %v31
    %52 = vmatpush.msra.mxu0 %v30
    %53 = vmatpush.msra.mxu0 %v29
    %54 = vmatpush.msra.mxu0 %v28
    %55 = vmatpush.msra.mxu0 %v27
    %56 = vmatpush.msra.mxu0 %v26
    %57 = vmatpush.msra.mxu0 %v25
    %58 = vmatpush.msra.mxu0 %v24
    %59 = vmatpush.msra.mxu0 %v23
    %60 = vmatpush.msra.mxu0 %v22
    %61 = vmatmul.f32.gmra.mxu0 %v43
    %v62 = vpop.f32.mrf.mxu0
    %v63 = vadd.f32 %v39, %v62
    %64 = vdwg.mxu0
    %vm65 = vcmp.gt.f32.partialorder %v63, 0.0
    %v66 = vmul.f32 %v63, 0.01
    %v67 = vsel %vm65, %v63, %v66
    %v68 = vld [vmem:[%s3] sm:$0xff]
    %v69 = vld [vmem:[%s3 + $0x8] sm:$0xff]
    %v70 = vld [vmem:[%s3 + $0x10] sm:$0xff]
    %v71 = vld [vmem:[%s3 + $0x18] sm:$0xff]
    %v72 = vld [vmem:[%s3 + $0x20] sm:$0xff]
    %v73 = vld [vmem:[%s3 + $0x28] sm:$0xff]
    %v74 = vld [vmem:[%s3 + $0x30] sm:$0xff]
    %v75 = vld [vmem:[%s3 + $0x38] sm:$0xf]
    %v76 = vld [vmem:[%s4] sm:$0x1]
    %v78 = vperm.slane %v76, 0
    %vm80 = vcmask 490496
    %v82 = vsel %vm80, %v67, 0
    %vm84 = vcmask 1043456
    %v86 = vsel %vm84, %v75, 0
    %88 = vmatpush.msra.mxu0 0.0
    %89 = vmatpush.msra.mxu0 0.0
    %90 = vmatpush.msra.mxu0 0.0
    %91 = vmatpush.msra.mxu0 0.0
    %92 = vmatpush.msra.mxu0 0.0
    %93 = vmatpush.msra.mxu0 0.0
    %94 = vmatpush.msra.mxu0 0.0
    %95 = vmatpush.msra.mxu0 0.0
    %96 = vmatpush.msra.mxu0 %v86
    %97 = vmatpush.msra.mxu0 %v74
    %98 = vmatpush.msra.mxu0 %v73
    %99 = vmatpush.msra.mxu0 %v72
    %100 = vmatpush.msra.mxu0 %v71
    %101 = vmatpush.msra.mxu0 %v70
    %102 = vmatpush.msra.mxu0 %v69
    %103 = vmatpush.msra.mxu0 %v68
    %104 = vmatmul.f32.gmra.mxu0 %v82
    %v105 = vpop.f32.mrf.mxu0
    %v106 = vadd.f32 %v78, %v105
    %107 = vdwg.mxu0
    %vm108 = vcmp.gt.f32.partialorder %v106, 0.0
    %v109 = vmul.f32 %v106, 0.01
    %v110 = vsel %vm108, %v106, %v109
    %vm111 = vcmask 244736
    %112 = vst.msk [vmem:[#allocation2] sm:$0xff] %vm111, %v110
    // Predicated region
    $region22: #{tpu_custom_call.1} parent=1 // pred_check
      _
    $region23: #{tpu_custom_call.1} parent=1 // pred_check_branch
      %114 = sbr.rel (0) target = $region25
    $region24: #{tpu_custom_call.1} parent=1 // pred_region
      %116 = vsyncadd [#allocation3], 0
      %s118 = sshll.u32 [#allocation2], 4
      %s119 = int_to_ptr.vmem [resolvable:$true] %s118
      %s120 = sshll.u32 %s5, 4
      %s121 = int_to_ptr.hbm [resolvable:$true] %s120
      %123 = dma.vmem_to_hbm [thread:$0]  %s119, 128, %s121, [#allocation3]
    $region25: #{tpu_custom_call.1} parent=1 // pred_fallthru
      _
    // Predicated region
    $region26: #{tpu_custom_call.1} parent=1 // pred_check
      _
    $region27: #{tpu_custom_call.1} parent=1 // pred_check_branch
      %125 = sbr.rel (0) target = $region29
    $region28: #{tpu_custom_call.1} parent=1 // pred_region
      %127 = dma.done [#allocation3], 128
    $region29: #{tpu_custom_call.1} parent=1 // pred_fallthru
      _
    %128 = vsyncpa [#allocation3], 1

</llo_original>
